<compile_context>
chip_gen: v6e
topology: v6e:2x2x1
jax: 0.10.0
libtpu: 0.0.40
codegen_flags: <defaults>
</compile_context>

<pallas_src>
import jax
import jax.numpy as jnp
from jax.experimental import pallas as pl
from jax.experimental.pallas import tpu as pltpu

_TILE_BYTES = 2 * 1024 * 1024     # per-block byte budget (safe on v5e/v6e/v7x defaults)
_LANE_TARGET = 2048               # target lane width for the (B, S*D) layout


def _add_pos_kernel(x_ref, pos_ref, o_ref):
    # Elementwise broadcasted add; pos_ref is (1, TC) or (TR, D).
    o_ref[...] = x_ref[...] + pos_ref[...]


def _round_down(x, m):
    return (x // m) * m


def _sublane_align(dtype):
    return {4: 8, 2: 16, 1: 32}.get(jnp.dtype(dtype).itemsize, 8)


def learned_positional_encoding(x, pos_table):
    """x: (B, S, D), pos_table: (max_pos, D) with max_pos >= S.
    Returns x + pos_table[:S] broadcast over batch (PyTorch semantics)."""
    B, S, D = x.shape
    dtype = x.dtype
    itemsize = jnp.dtype(dtype).itemsize
    sub = _sublane_align(dtype)

    params = pltpu.CompilerParams(dimension_semantics=("parallel", "parallel"))

    if D % 128 == 0 and S % sub == 0 and sub * D * itemsize <= _TILE_BYTES:
        # ---- layout A: (B*S, D) rows, pos read straight from the table ------
        xr = x.reshape(B * S, D)
        tr = min(S, max(sub, _round_down(_TILE_BYTES // (D * itemsize), sub)))
        while S % tr != 0:            # keep seq tiles exact so pos rows line up
            tr -= sub
        n_seq = S // tr

        out = pl.pallas_call(
            _add_pos_kernel,
            out_shape=jax.ShapeDtypeStruct((B * S, D), dtype),
            grid=(n_seq, B),          # seq-tile OUTER -> pos block reused over batch
            in_specs=[
                pl.BlockSpec((tr, D), lambda j, i, n=n_seq: (i * n + j, 0)),
                pl.BlockSpec((tr, D), lambda j, i: (j, 0)),
            ],
            out_specs=pl.BlockSpec((tr, D), lambda j, i, n=n_seq: (i * n + j, 0)),
            input_output_aliases={0: 0},
            compiler_params=params,
        )(xr, pos_table)
        return out.reshape(B, S, D)

    # ---- layout B: lane-dense (B, S*D) view ----------------------------------
    C = S * D
    x2 = x.reshape(B, C)
    pos2 = jax.lax.slice(pos_table, (0, 0), (S, D)).reshape(1, C)

    if C >= 128:
        tc = min(_LANE_TARGET, _round_down(C, 128))   # 128-aligned lane tile
    else:
        tc = C                                        # tiny: full-extent block is legal
    row_budget = max(sub, _round_down(max(_TILE_BYTES // (tc * itemsize), sub), sub))
    tb = min(_round_down(B, sub), row_budget) if B >= sub else B

    grid = (pl.cdiv(C, tc), pl.cdiv(B, tb))           # lane-tile OUTER -> pos reused

    out2 = pl.pallas_call(
        _add_pos_kernel,
        out_shape=jax.ShapeDtypeStruct((B, C), dtype),
        grid=grid,
        in_specs=[
            pl.BlockSpec((tb, tc), lambda j, i: (i, j)),
            pl.BlockSpec((1, tc), lambda j, i: (0, j)),   # constant over inner i loop
        ],
        out_specs=pl.BlockSpec((tb, tc), lambda j, i: (i, j)),
        input_output_aliases={0: 0},
        compiler_params=params,
    )(x2, pos2)
    return out2.reshape(B, S, D)


if __name__ == "__main__":
    key = jax.random.PRNGKey(0)
    kx, kt, kx2, kt2 = jax.random.split(key, 4)

    # Donate x so input_output_aliases actually reuses its HBM buffer.
    fwd = jax.jit(learned_positional_encoding, donate_argnums=0)

    MAX_LENGTH = 10
    MAX_POS = MAX_LENGTH + 2        # nn.Embedding(max_length + 2, d_model)

    # Case 1: module-consistent small shape (d_model=32) -> lane-dense (B, S*D) path.
    B, S, D = 2, 8, 32
    x = jax.random.normal(kx, (B, S, D), jnp.float32)
    tbl = 0.02 * jax.random.normal(kt, (MAX_POS, D), jnp.float32)
    ref = x + tbl[:S][None, :, :]   # pure-JAX reference, computed before donation
    out = jax.block_until_ready(fwd(x, tbl))
    assert out.shape == (B, S, D)
    assert bool(jnp.all(jnp.isfinite(out)))
    assert bool(jnp.allclose(out, ref, atol=1e-6, rtol=1e-6))

    # Case 2: d_model=128 exercises the (B*S, D) path (pos straight from the table).
    B2, S2, D2 = 2, 8, 128
    x_b = jax.random.normal(kx2, (B2, S2, D2), jnp.float32)
    tbl_b = 0.02 * jax.random.normal(kt2, (MAX_POS, D2), jnp.float32)
    ref_b = x_b + tbl_b[:S2][None, :, :]
    out_b = jax.block_until_ready(fwd(x_b, tbl_b))
    assert bool(jnp.allclose(out_b, ref_b, atol=1e-6, rtol=1e-6))

    print("KERNEL_OK")
</pallas_src>

<mosaic_0001>
module attributes {stable_mosaic.version = 11 : i64} {
  func.func @_add_pos_kernel(%arg0: i32, %arg1: i32, %arg2: memref<2x256xf32, #tpu.memory_space<vmem>>, %arg3: memref<1x256xf32, #tpu.memory_space<vmem>>, %arg4: memref<2x256xf32, #tpu.memory_space<vmem>>) attributes {dimension_semantics = [#tpu.dimension_semantics<parallel>, #tpu.dimension_semantics<parallel>], iteration_bounds = array<i64: 1, 1>, scalar_prefetch = 0 : i64, scratch_operands = 0 : i64, tpu.core_type = #tpu.core_type<tc>, window_params = [{transform_indices = @transform_0, window_bounds = array<i64: 2, 256>}, {transform_indices = @transform_1, window_bounds = array<i64: 1, 256>}, {transform_indices = @transform_2, window_bounds = array<i64: 2, 256>}]} {
    %c0 = arith.constant 0 : index
    %c0_0 = arith.constant 0 : index
    %0 = vector.load %arg2[%c0, %c0_0] : memref<2x256xf32, #tpu.memory_space<vmem>>, vector<2x256xf32>
    %c0_1 = arith.constant 0 : index
    %c0_2 = arith.constant 0 : index
    %1 = vector.load %arg3[%c0_1, %c0_2] : memref<1x256xf32, #tpu.memory_space<vmem>>, vector<1x256xf32>
    %2 = vector.broadcast %1 : vector<1x256xf32> to vector<2x256xf32>
    %3 = arith.addf %0, %2 : vector<2x256xf32>
    %c0_3 = arith.constant 0 : index
    %c0_4 = arith.constant 0 : index
    %4 = vector.load %arg4[%c0_3, %c0_4] : memref<2x256xf32, #tpu.memory_space<vmem>>, vector<2x256xf32>
    tpu.vector_store %arg4[%c0_3, %c0_4], %3 {strides = array<i32>} : memref<2x256xf32, #tpu.memory_space<vmem>>, vector<2x256xf32>,
    return
  }
  func.func @transform_0(%arg0: i32, %arg1: i32) -> (i32, i32) {
    %c0_i32 = arith.constant 0 : i32
    return %arg1, %arg0 : i32, i32
  }
  func.func @transform_1(%arg0: i32, %arg1: i32) -> (i32, i32) {
    %c0_i32 = arith.constant 0 : i32
    %c0_i32_0 = arith.constant 0 : i32
    return %c0_i32, %arg0 : i32, i32
  }
  func.func @transform_2(%arg0: i32, %arg1: i32) -> (i32, i32) {
    %c0_i32 = arith.constant 0 : i32
    return %arg1, %arg0 : i32, i32
  }
}

</mosaic_0001>

<llo_original>
// kernel: learned_positional_encoding.1
$region0: #{learned_positional_encoding.1}
  #allocation0 [shape = 'u32[]', space=smem, size = 0x4, offset = 0x4, fixed_abs, tag = 'smem constant byte address 0x4 - core index']
  #allocation1 [shape = 'u32[144,128]{1,0:T(1,128)}', space=vmem, size = 0x12000, scoped, tag = 'internal scratch']
  %s0 = inlined_call_operand.vmem [shape: f32[2,256], index: 0, kind: input, shape index: {}, may-alias: {0,2}]
  %s1 = inlined_call_operand.vmem [shape: f32[1,256], index: 1, kind: input, shape index: {}]
  %s2 = inlined_call_operand.vmem [shape: f32[2,256], index: 2, kind: output, shape index: {}, may-alias: {0,2}]
  %s3 = sld [smem:[#allocation0]]
  $region18: #{learned_positional_encoding.1} parent=0
    _
  %s5 = ssub.s32 1, %s3
  %s6 = scalar_select 0, %s5, %s3
  // Predicated region
  $region2: #{learned_positional_encoding.1} parent=0 // pred_check
    _
  $region3: #{learned_positional_encoding.1} parent=0 // pred_check_branch
    %8 = sbr.rel (0) target = $region5
  $region4: #{learned_positional_encoding.1} parent=0 // pred_region
    _
  $region5: #{learned_positional_encoding.1} parent=0 // pred_fallthru
    _
  // Predicated region
  $region6: #{learned_positional_encoding.1} parent=0 // pred_check
    _
  $region7: #{learned_positional_encoding.1} parent=0 // pred_check_branch
    %10 = sbr.rel (0) target = $region9
  $region8: #{learned_positional_encoding.1} parent=0 // pred_region
    _
  $region9: #{learned_positional_encoding.1} parent=0 // pred_fallthru
    _
  %v11 = vld [vmem:[%s0] sm:$0xf]
  %v12 = vld [vmem:[%s1] sm:$0x3]
  %v14 = vlaneseq
  %v15 = vshrl.u32 %v14, 7
  %v16 = vsub.s32 0, %v15
  %v17 = vrot.slane %v12, %v16
  %v18 = vlaneseq
  %v19 = vshrl.u32 %v18, 7
  %v20 = vsub.s32 1, %v19
  %v21 = vrot.slane %v12, %v20
  %v22 = vcombine.low %v17, %v21
  %v24 = vunpack.c.l.s4 1983009808
  %v25 = vunpack.c.0.s8 %v24
  %v26 = vlaneseq
  %v27 = vshrl.u32 %v26, 7
  %v28 = vsub.s32 %v25, %v27
  %v29 = vrot.slane %v22, %v28
  %v31 = vadd.f32 %v11, %v29
  %32 = vst [vmem:[%s2] sm:$0xf] %v31
  // Predicated region
  $region10: #{learned_positional_encoding.1} parent=0 // pred_check
    _
  $region11: #{learned_positional_encoding.1} parent=0 // pred_check_branch
    %34 = sbr.rel (0) target = $region13
  $region12: #{learned_positional_encoding.1} parent=0 // pred_region
    _
  $region13: #{learned_positional_encoding.1} parent=0 // pred_fallthru
    _
  // Predicated region
  $region14: #{learned_positional_encoding.1} parent=0 // pred_check
    _
  $region15: #{learned_positional_encoding.1} parent=0 // pred_check_branch
    %36 = sbr.rel (0) target = $region17
  $region16: #{learned_positional_encoding.1} parent=0 // pred_region
    _
  $region17: #{learned_positional_encoding.1} parent=0 // pred_fallthru
    _

</llo_original>
